<compile_context>
chip_gen: v6e
topology: v6e:2x2x1
jax: 0.10.0
libtpu: 0.0.40
codegen_flags: <defaults>
</compile_context>

<pallas_src>
import functools

import jax
import jax.numpy as jnp
from jax.experimental import pallas as pl
from jax.experimental.pallas import tpu as pltpu


def _mlp_kernel(x_ref, w1_ref, b1_ref, w2_ref, b2_ref, w3_ref, b3_ref, o_ref):
    # layer1: Linear (bf16 operands, f32 accumulation) + bias + ReLU in f32
    h1 = jnp.dot(x_ref[...], w1_ref[...], preferred_element_type=jnp.float32)
    h1 = jnp.maximum(h1 + b1_ref[...], 0.0)
    # layer2
    h2 = jnp.dot(h1.astype(w2_ref.dtype), w2_ref[...],
                 preferred_element_type=jnp.float32)
    h2 = jnp.maximum(h2 + b2_ref[...], 0.0)
    # layer3 (no activation)
    out = jnp.dot(h2.astype(w3_ref.dtype), w3_ref[...],
                  preferred_element_type=jnp.float32) + b3_ref[...]
    o_ref[...] = out.astype(o_ref.dtype)


def _round_up(n, m):
    return ((n + m - 1) // m) * m


@functools.partial(jax.jit, static_argnames=("tile_b",))
def linear_net_forward(x, params, tile_b=256):
    """Fused 3-layer MLP forward. x: [B, in_dim] float32 -> [B, out_dim] float32."""
    w1, b1, w2, b2, w3, b3 = params
    B, in_dim = x.shape
    h1_dim = w1.shape[1]
    h2_dim = w2.shape[1]
    out_dim = w3.shape[1]
    out_dtype = x.dtype

    # bf16 matmul operands for the MXU; biases stay f32 (f32 epilogue math).
    xb = x.astype(jnp.bfloat16)
    w1b, w2b, w3b = (w.astype(jnp.bfloat16) for w in (w1, w2, w3))
    b1f, b2f, b3f = (b.astype(jnp.float32) for b in (b1, b2, b3))

    # Batch tile: multiple of 8 sublanes (256 fills the MXU row dim on
    # v6e/v7x); shrink for small batches. Pad B up so every block is full.
    tb = min(tile_b, _round_up(B, 8))
    b_pad = _round_up(B, tb)
    if b_pad != B:
        xb = jnp.pad(xb, ((0, b_pad - B), (0, 0)))
    grid = (b_pad // tb,)

    # Weights / biases: same block for every grid step -> loaded into VMEM once.
    resident = lambda a: pl.BlockSpec(a.shape, lambda i: (0, 0))

    out_padded = pl.pallas_call(
        _mlp_kernel,
        out_shape=jax.ShapeDtypeStruct((b_pad, out_dim), out_dtype),
        grid=grid,
        in_specs=[
            pl.BlockSpec((tb, in_dim), lambda i: (i, 0)),   # x: streamed per tile
            resident(w1b), resident(b1f),
            resident(w2b), resident(b2f),
            resident(w3b), resident(b3f),
        ],
        out_specs=pl.BlockSpec((tb, out_dim), lambda i: (i, 0)),
        compiler_params=pltpu.CompilerParams(
            dimension_semantics=("parallel",),          # megacore on v7x
            vmem_limit_bytes=32 * 1024 * 1024,          # fits v7x 64 MiB phys
        ),
    )(xb, w1b, b1f, w2b, b2f, w3b, b3f)

    return out_padded[:B] if b_pad != B else out_padded


def init_linear_net_params(key, in_dim, n_hidden_1, n_hidden_2, out_dim,
                           dtype=jnp.float32):
    """Deterministic init matching nn.Linear's U(-1/sqrt(fan_in), 1/sqrt(fan_in))."""
    def linear(k, fan_in, fan_out):
        kw, kb = jax.random.split(k)
        bound = 1.0 / jnp.sqrt(jnp.asarray(fan_in, dtype))
        w = jax.random.uniform(kw, (fan_in, fan_out), dtype, -bound, bound)
        b = jax.random.uniform(kb, (1, fan_out), dtype, -bound, bound)
        return w, b

    k1, k2, k3 = jax.random.split(key, 3)
    w1, b1 = linear(k1, in_dim, n_hidden_1)
    w2, b2 = linear(k2, n_hidden_1, n_hidden_2)
    w3, b3 = linear(k3, n_hidden_2, out_dim)
    return (w1, b1, w2, b2, w3, b3)


def _reference_forward_f32(x, params):
    w1, b1, w2, b2, w3, b3 = params
    h1 = jnp.maximum(x @ w1 + b1, 0.0)
    h2 = jnp.maximum(h1 @ w2 + b2, 0.0)
    return h2 @ w3 + b3


def _reference_forward_bf16(x, params):
    """Same math as the kernel (bf16 matmul operands, f32 accumulation)."""
    w1, b1, w2, b2, w3, b3 = params
    bf = jnp.bfloat16
    h1 = jnp.dot(x.astype(bf), w1.astype(bf), preferred_element_type=jnp.float32)
    h1 = jnp.maximum(h1 + b1, 0.0)
    h2 = jnp.dot(h1.astype(bf), w2.astype(bf), preferred_element_type=jnp.float32)
    h2 = jnp.maximum(h2 + b2, 0.0)
    return jnp.dot(h2.astype(bf), w3.astype(bf),
                   preferred_element_type=jnp.float32) + b3


if __name__ == "__main__":
    # Module-consistent small shapes. B=500 deliberately exercises both the
    # batch-tiled grid (2 tiles of 256) and the pad/slice path.
    B, IN, H1, H2, OUT = 500, 32, 64, 64, 16

    key = jax.random.PRNGKey(0)
    kx, kp = jax.random.split(key)
    x = jax.random.normal(kx, (B, IN), jnp.float32)
    params = init_linear_net_params(kp, IN, H1, H2, OUT)

    out = linear_net_forward(x, params)
    out = jax.block_until_ready(out)
    assert out.shape == (B, OUT)
    assert out.dtype == jnp.float32

    # Exact-semantics check against a JAX reference doing the same bf16 matmuls.
    ref_bf16 = _reference_forward_bf16(x, params)
    assert jnp.allclose(out, ref_bf16, atol=1e-4, rtol=1e-4), \
        "mismatch vs bf16-matmul JAX reference"

    # Sanity check against the full-f32 PyTorch-equivalent forward
    # (looser tolerance: bf16 operand rounding in the matmuls).
    ref_f32 = _reference_forward_f32(x, params)
    assert jnp.allclose(out, ref_f32, atol=5e-2, rtol=5e-2), \
        "mismatch vs f32 JAX reference"

    print("KERNEL_OK")
</pallas_src>

<mosaic_0001>
module attributes {stable_mosaic.version = 11 : i64} {
  func.func @_mlp_kernel(%arg0: i32, %arg1: memref<256x32xbf16, #tpu.memory_space<vmem>>, %arg2: memref<32x64xbf16, #tpu.memory_space<vmem>>, %arg3: memref<1x64xf32, #tpu.memory_space<vmem>>, %arg4: memref<64x64xbf16, #tpu.memory_space<vmem>>, %arg5: memref<1x64xf32, #tpu.memory_space<vmem>>, %arg6: memref<64x16xbf16, #tpu.memory_space<vmem>>, %arg7: memref<1x16xf32, #tpu.memory_space<vmem>>, %arg8: memref<256x16xf32, #tpu.memory_space<vmem>>) attributes {dimension_semantics = [#tpu.dimension_semantics<parallel>], iteration_bounds = array<i64: 2>, scalar_prefetch = 0 : i64, scratch_operands = 0 : i64, tpu.core_type = #tpu.core_type<tc>, window_params = [{transform_indices = @transform_0, window_bounds = array<i64: 256, 32>}, {pipeline_mode = #tpu.pipeline_mode<synchronous>, transform_indices = @transform_1, window_bounds = array<i64: 32, 64>}, {pipeline_mode = #tpu.pipeline_mode<synchronous>, transform_indices = @transform_2, window_bounds = array<i64: 1, 64>}, {pipeline_mode = #tpu.pipeline_mode<synchronous>, transform_indices = @transform_3, window_bounds = array<i64: 64, 64>}, {pipeline_mode = #tpu.pipeline_mode<synchronous>, transform_indices = @transform_4, window_bounds = array<i64: 1, 64>}, {pipeline_mode = #tpu.pipeline_mode<synchronous>, transform_indices = @transform_5, window_bounds = array<i64: 64, 16>}, {pipeline_mode = #tpu.pipeline_mode<synchronous>, transform_indices = @transform_6, window_bounds = array<i64: 1, 16>}, {transform_indices = @transform_7, window_bounds = array<i64: 256, 16>}]} {
    %c0 = arith.constant 0 : index
    %c0_0 = arith.constant 0 : index
    %0 = vector.load %arg1[%c0, %c0_0] : memref<256x32xbf16, #tpu.memory_space<vmem>>, vector<256x32xbf16>
    %c0_1 = arith.constant 0 : index
    %c0_2 = arith.constant 0 : index
    %1 = vector.load %arg2[%c0_1, %c0_2] : memref<32x64xbf16, #tpu.memory_space<vmem>>, vector<32x64xbf16>
    %cst = arith.constant dense<0.000000e+00> : vector<256x64xf32>
    %2 = tpu.matmul %0, %1, %cst {dimension_numbers = #tpu.dot_dimension_numbers<[1], [0], [0], [1], [0, 0, 1, 1], [], []>} : vector<256x32xbf16>, vector<32x64xbf16>, vector<256x64xf32> -> vector<256x64xf32>
    %c0_3 = arith.constant 0 : index
    %c0_4 = arith.constant 0 : index
    %3 = vector.load %arg3[%c0_3, %c0_4] : memref<1x64xf32, #tpu.memory_space<vmem>>, vector<1x64xf32>
    %4 = vector.broadcast %3 : vector<1x64xf32> to vector<256x64xf32>
    %5 = arith.addf %2, %4 : vector<256x64xf32>
    %cst_5 = arith.constant 0.000000e+00 : f32
    %6 = vector.broadcast %cst_5 : f32 to vector<256x64xf32>
    %7 = arith.maximumf %5, %6 : vector<256x64xf32>
    %8 = arith.truncf %7 : vector<256x64xf32> to vector<256x64xbf16>
    %c0_6 = arith.constant 0 : index
    %c0_7 = arith.constant 0 : index
    %9 = vector.load %arg4[%c0_6, %c0_7] : memref<64x64xbf16, #tpu.memory_space<vmem>>, vector<64x64xbf16>
    %cst_8 = arith.constant dense<0.000000e+00> : vector<256x64xf32>
    %10 = tpu.matmul %8, %9, %cst_8 {dimension_numbers = #tpu.dot_dimension_numbers<[1], [0], [0], [1], [0, 0, 1, 1], [], []>} : vector<256x64xbf16>, vector<64x64xbf16>, vector<256x64xf32> -> vector<256x64xf32>
    %c0_9 = arith.constant 0 : index
    %c0_10 = arith.constant 0 : index
    %11 = vector.load %arg5[%c0_9, %c0_10] : memref<1x64xf32, #tpu.memory_space<vmem>>, vector<1x64xf32>
    %12 = vector.broadcast %11 : vector<1x64xf32> to vector<256x64xf32>
    %13 = arith.addf %10, %12 : vector<256x64xf32>
    %cst_11 = arith.constant 0.000000e+00 : f32
    %14 = vector.broadcast %cst_11 : f32 to vector<256x64xf32>
    %15 = arith.maximumf %13, %14 : vector<256x64xf32>
    %16 = arith.truncf %15 : vector<256x64xf32> to vector<256x64xbf16>
    %c0_12 = arith.constant 0 : index
    %c0_13 = arith.constant 0 : index
    %17 = vector.load %arg6[%c0_12, %c0_13] : memref<64x16xbf16, #tpu.memory_space<vmem>>, vector<64x16xbf16>
    %cst_14 = arith.constant dense<0.000000e+00> : vector<256x16xf32>
    %18 = tpu.matmul %16, %17, %cst_14 {dimension_numbers = #tpu.dot_dimension_numbers<[1], [0], [0], [1], [0, 0, 1, 1], [], []>} : vector<256x64xbf16>, vector<64x16xbf16>, vector<256x16xf32> -> vector<256x16xf32>
    %c0_15 = arith.constant 0 : index
    %c0_16 = arith.constant 0 : index
    %19 = vector.load %arg7[%c0_15, %c0_16] : memref<1x16xf32, #tpu.memory_space<vmem>>, vector<1x16xf32>
    %20 = vector.broadcast %19 : vector<1x16xf32> to vector<256x16xf32>
    %21 = arith.addf %18, %20 : vector<256x16xf32>
    %c0_17 = arith.constant 0 : index
    %c0_18 = arith.constant 0 : index
    %22 = vector.load %arg8[%c0_17, %c0_18] : memref<256x16xf32, #tpu.memory_space<vmem>>, vector<256x16xf32>
    tpu.vector_store %arg8[%c0_17, %c0_18], %21 {strides = array<i32>} : memref<256x16xf32, #tpu.memory_space<vmem>>, vector<256x16xf32>,
    return
  }
  func.func @transform_0(%arg0: i32) -> (i32, i32) {
    %c0_i32 = arith.constant 0 : i32
    %c0_i32_0 = arith.constant 0 : i32
    return %arg0, %c0_i32 : i32, i32
  }
  func.func @transform_1(%arg0: i32) -> (i32, i32) {
    %c0_i32 = arith.constant 0 : i32
    %c0_i32_0 = arith.constant 0 : i32
    %c0_i32_1 = arith.constant 0 : i32
    return %c0_i32, %c0_i32_0 : i32, i32
  }
  func.func @transform_2(%arg0: i32) -> (i32, i32) {
    %c0_i32 = arith.constant 0 : i32
    %c0_i32_0 = arith.constant 0 : i32
    %c0_i32_1 = arith.constant 0 : i32
    return %c0_i32, %c0_i32_0 : i32, i32
  }
  func.func @transform_3(%arg0: i32) -> (i32, i32) {
    %c0_i32 = arith.constant 0 : i32
    %c0_i32_0 = arith.constant 0 : i32
    %c0_i32_1 = arith.constant 0 : i32
    return %c0_i32, %c0_i32_0 : i32, i32
  }
  func.func @transform_4(%arg0: i32) -> (i32, i32) {
    %c0_i32 = arith.constant 0 : i32
    %c0_i32_0 = arith.constant 0 : i32
    %c0_i32_1 = arith.constant 0 : i32
    return %c0_i32, %c0_i32_0 : i32, i32
  }
  func.func @transform_5(%arg0: i32) -> (i32, i32) {
    %c0_i32 = arith.constant 0 : i32
    %c0_i32_0 = arith.constant 0 : i32
    %c0_i32_1 = arith.constant 0 : i32
    return %c0_i32, %c0_i32_0 : i32, i32
  }
  func.func @transform_6(%arg0: i32) -> (i32, i32) {
    %c0_i32 = arith.constant 0 : i32
    %c0_i32_0 = arith.constant 0 : i32
    %c0_i32_1 = arith.constant 0 : i32
    return %c0_i32, %c0_i32_0 : i32, i32
  }
  func.func @transform_7(%arg0: i32) -> (i32, i32) {
    %c0_i32 = arith.constant 0 : i32
    %c0_i32_0 = arith.constant 0 : i32
    return %arg0, %c0_i32 : i32, i32
  }
}

</mosaic_0001>

<llo_original>
// kernel: linear_net_forward.1
$region0: #{linear_net_forward.1}
  #allocation0 [shape = 'u32[]', space=smem, size = 0x4, offset = 0x4, fixed_abs, tag = 'smem constant byte address 0x4 - core index']
  #allocation1 [shape = 'u32[144,128]{1,0:T(1,128)}', space=vmem, size = 0x12000, scoped, tag = 'internal scratch']
  %s0 = inlined_call_operand.vmem [shape: bf16[512,32], index: 0, kind: input, shape index: {}]
  %s1 = inlined_call_operand.vmem [shape: bf16[32,64], index: 1, kind: input, shape index: {}]
  %s2 = inlined_call_operand.vmem [shape: f32[1,64], index: 2, kind: input, shape index: {}]
  %s3 = inlined_call_operand.vmem [shape: bf16[64,64], index: 3, kind: input, shape index: {}]
  %s4 = inlined_call_operand.vmem [shape: f32[1,64], index: 4, kind: input, shape index: {}]
  %s5 = inlined_call_operand.vmem [shape: bf16[64,16], index: 5, kind: input, shape index: {}]
  %s6 = inlined_call_operand.vmem [shape: f32[1,16], index: 6, kind: input, shape index: {}]
  %s7 = inlined_call_operand.vmem [shape: f32[512,16], index: 7, kind: output, shape index: {}]
  %s8 = sld [smem:[#allocation0]]
  $region61: #{linear_net_forward.1} parent=0
    _
  %s10 = ssub.s32 1, %s8
  %s11 = scalar_select 0, %s10, %s8
  loop: start=0, step=1, limit=4
  $region2: #{linear_net_forward.1} parent=0 // loop_pre_header
    _
  $region3: #{linear_net_forward.1} parent=0 // loop_header
    %s13 = sphi 0, %s17
    %p14 = scmp.ge.s32.totalorder %s13, 4
    %s23 = sphi 0, %s25
    %s26 = sphi 0, %s23
    %s27 = sphi 0, %s26
    %s43 = sphi 0, %s27
    %s47 = sphi 0, %s47
    %s49 = sphi 0, %s47
    %s50 = sphi 0, %s49
    %s64 = sphi 0, %s50
    %s68 = sphi 0, %s68
    %s70 = sphi 0, %s68
    %s71 = sphi 0, %s70
    %s85 = sphi 0, %s71
    %s89 = sphi 0, %s89
    %s91 = sphi 0, %s89
    %s92 = sphi 0, %s91
    %s106 = sphi 0, %s92
    %s110 = sphi 0, %s110
    %s112 = sphi 0, %s110
    %s113 = sphi 0, %s112
    %s127 = sphi 0, %s113
    %s131 = sphi 0, %s131
    %s133 = sphi 0, %s131
    %s134 = sphi 0, %s133
    %s148 = sphi 0, %s134
    %s152 = sphi 0, %s152
    %s154 = sphi 0, %s152
    %s155 = sphi 0, %s154
    %s169 = sphi 0, %s155
    %s175 = sphi 0, %s177
    %s178 = sphi 0, %s175
    %s179 = sphi 0, %s178
    %s195 = sphi 0, %s179
  $region4: #{linear_net_forward.1} parent=0 // loop_header_branch
    %16 = sbr.rel (%p14) target = $region8
  $region5: #{linear_net_forward.1} parent=0 // loop_body
    %s18 = ssub.s32 %s13, 1
    %s19 = ssub.s32 %s13, 2
    %s20 = sadd.s32 %s13, 1
    %s21 = ssub.s32 %s13, %s20
    %p22 = scmp.eq.s32.totalorder %s21, 0
    %s24 = sadd.s32 %s23, 1
    %s25 = scalar_select %p22, %s23, %s24
    %p28 = pneg %p22
    %p29 = scmp.eq.s32.totalorder %s13, 1
    %p30 = por %p28, %p29
    %p31 = scmp.ne.s32.totalorder %s23, %s26
    %p32 = scmp.eq.s32.totalorder %s13, 0
    %p33 = por %p31, %p32
    %p34 = scmp.ne.s32.totalorder %s23, %s26
    %p35 = scmp.eq.s32.totalorder %s18, 1
    %p36 = por %p34, %p35
    %p37 = scmp.ne.s32.totalorder %s26, %s27
    %p38 = scmp.eq.s32.totalorder %s18, 0
    %p39 = por %p37, %p38
    %p40 = scmp.ne.s32.totalorder %s26, %s27
    %p41 = scmp.eq.s32.totalorder %s19, 1
    %p42 = por %p40, %p41
    %p44 = scmp.ne.s32.totalorder %s27, %s43
    %p45 = scmp.eq.s32.totalorder %s19, 0
    %p46 = por %p44, %p45
    %s48 = sadd.s32 %s47, 1
    %p51 = scmp.eq.s32.totalorder %s13, 1
    %p52 = scmp.ne.s32.totalorder %s47, %s49
    %p53 = scmp.eq.s32.totalorder %s13, 0
    %p54 = por %p52, %p53
    %p55 = scmp.ne.s32.totalorder %s47, %s49
    %p56 = scmp.eq.s32.totalorder %s18, 1
    %p57 = por %p55, %p56
    %p58 = scmp.ne.s32.totalorder %s49, %s50
    %p59 = scmp.eq.s32.totalorder %s18, 0
    %p60 = por %p58, %p59
    %p61 = scmp.ne.s32.totalorder %s49, %s50
    %p62 = scmp.eq.s32.totalorder %s19, 1
    %p63 = por %p61, %p62
    %p65 = scmp.ne.s32.totalorder %s50, %s64
    %p66 = scmp.eq.s32.totalorder %s19, 0
    %p67 = por %p65, %p66
    %s69 = sadd.s32 %s68, 1
    %p72 = scmp.eq.s32.totalorder %s13, 1
    %p73 = scmp.ne.s32.totalorder %s68, %s70
    %p74 = scmp.eq.s32.totalorder %s13, 0
    %p75 = por %p73, %p74
    %p76 = scmp.ne.s32.totalorder %s68, %s70
    %p77 = scmp.eq.s32.totalorder %s18, 1
    %p78 = por %p76, %p77
    %p79 = scmp.ne.s32.totalorder %s70, %s71
    %p80 = scmp.eq.s32.totalorder %s18, 0
    %p81 = por %p79, %p80
    %p82 = scmp.ne.s32.totalorder %s70, %s71
    %p83 = scmp.eq.s32.totalorder %s19, 1
    %p84 = por %p82, %p83
    %p86 = scmp.ne.s32.totalorder %s71, %s85
    %p87 = scmp.eq.s32.totalorder %s19, 0
    %p88 = por %p86, %p87
    %s90 = sadd.s32 %s89, 1
    %p93 = scmp.eq.s32.totalorder %s13, 1
    %p94 = scmp.ne.s32.totalorder %s89, %s91
    %p95 = scmp.eq.s32.totalorder %s13, 0
    %p96 = por %p94, %p95
    %p97 = scmp.ne.s32.totalorder %s89, %s91
    %p98 = scmp.eq.s32.totalorder %s18, 1
    %p99 = por %p97, %p98
    %p100 = scmp.ne.s32.totalorder %s91, %s92
    %p101 = scmp.eq.s32.totalorder %s18, 0
    %p102 = por %p100, %p101
    %p103 = scmp.ne.s32.totalorder %s91, %s92
    %p104 = scmp.eq.s32.totalorder %s19, 1
    %p105 = por %p103, %p104
    %p107 = scmp.ne.s32.totalorder %s92, %s106
    %p108 = scmp.eq.s32.totalorder %s19, 0
    %p109 = por %p107, %p108
    %s111 = sadd.s32 %s110, 1
    %p114 = scmp.eq.s32.totalorder %s13, 1
    %p115 = scmp.ne.s32.totalorder %s110, %s112
    %p116 = scmp.eq.s32.totalorder %s13, 0
    %p117 = por %p115, %p116
    %p118 = scmp.ne.s32.totalorder %s110, %s112
    %p119 = scmp.eq.s32.totalorder %s18, 1
    %p120 = por %p118, %p119
    %p121 = scmp.ne.s32.totalorder %s112, %s113
    %p122 = scmp.eq.s32.totalorder %s18, 0
    %p123 = por %p121, %p122
    %p124 = scmp.ne.s32.totalorder %s112, %s113
    %p125 = scmp.eq.s32.totalorder %s19, 1
    %p126 = por %p124, %p125
    %p128 = scmp.ne.s32.totalorder %s113, %s127
    %p129 = scmp.eq.s32.totalorder %s19, 0
    %p130 = por %p128, %p129
    %s132 = sadd.s32 %s131, 1
    %p135 = scmp.eq.s32.totalorder %s13, 1
    %p136 = scmp.ne.s32.totalorder %s131, %s133
    %p137 = scmp.eq.s32.totalorder %s13, 0
    %p138 = por %p136, %p137
    %p139 = scmp.ne.s32.totalorder %s131, %s133
    %p140 = scmp.eq.s32.totalorder %s18, 1
    %p141 = por %p139, %p140
    %p142 = scmp.ne.s32.totalorder %s133, %s134
    %p143 = scmp.eq.s32.totalorder %s18, 0
    %p144 = por %p142, %p143
    %p145 = scmp.ne.s32.totalorder %s133, %s134
    %p146 = scmp.eq.s32.totalorder %s19, 1
    %p147 = por %p145, %p146
    %p149 = scmp.ne.s32.totalorder %s134, %s148
    %p150 = scmp.eq.s32.totalorder %s19, 0
    %p151 = por %p149, %p150
    %s153 = sadd.s32 %s152, 1
    %p156 = scmp.eq.s32.totalorder %s13, 1
    %p157 = scmp.ne.s32.totalorder %s152, %s154
    %p158 = scmp.eq.s32.totalorder %s13, 0
    %p159 = por %p157, %p158
    %p160 = scmp.ne.s32.totalorder %s152, %s154
    %p161 = scmp.eq.s32.totalorder %s18, 1
    %p162 = por %p160, %p161
    %p163 = scmp.ne.s32.totalorder %s154, %s155
    %p164 = scmp.eq.s32.totalorder %s18, 0
    %p165 = por %p163, %p164
    %p166 = scmp.ne.s32.totalorder %s154, %s155
    %p167 = scmp.eq.s32.totalorder %s19, 1
    %p168 = por %p166, %p167
    %p170 = scmp.ne.s32.totalorder %s155, %s169
    %p171 = scmp.eq.s32.totalorder %s19, 0
    %p172 = por %p170, %p171
    %s173 = ssub.s32 %s13, %s20
    %p174 = scmp.eq.s32.totalorder %s173, 0
    %s176 = sadd.s32 %s175, 1
    %s177 = scalar_select %p174, %s175, %s176
    %p180 = pneg %p174
    %p181 = scmp.eq.s32.totalorder %s13, 1
    %p182 = por %p180, %p181
    %p183 = scmp.ne.s32.totalorder %s175, %s178
    %p184 = scmp.eq.s32.totalorder %s13, 0
    %p185 = por %p183, %p184
    %p186 = scmp.ne.s32.totalorder %s175, %s178
    %p187 = scmp.eq.s32.totalorder %s18, 1
    %p188 = por %p186, %p187
    %p189 = scmp.ne.s32.totalorder %s178, %s179
    %p190 = scmp.eq.s32.totalorder %s18, 0
    %p191 = por %p189, %p190
    %p192 = scmp.ne.s32.totalorder %s178, %s179
    %p193 = scmp.eq.s32.totalorder %s19, 1
    %p194 = por %p192, %p193
    %p196 = scmp.ne.s32.totalorder %s179, %s195
    %p197 = scmp.eq.s32.totalorder %s19, 0
    %p198 = por %p196, %p197
    %p199 = scmp.le.s32.totalorder 1, %s13
    %p200 = scmp.lt.s32.totalorder %s13, 3
    %p201 = pnand %p199, %p200
    %p202 = pneg %p201
    // Predicated region
    $region9: #{linear_net_forward.1} parent=5 // pred_check
      _
    $region10: #{linear_net_forward.1} parent=5 // pred_check_branch
      %204 = sbr.rel (%p201) target = $region12
    $region11: #{linear_net_forward.1} parent=5 // pred_region
      %s205 = ssub.s32 %s13, 1
      // Predicated region
      $region13: #{linear_net_forward.1} parent=11 // pred_check
        %p206 = pneg %p60
      $region14: #{linear_net_forward.1} parent=11 // pred_check_branch
        %208 = sbr.rel (%p206) target = $region16
      $region15: #{linear_net_forward.1} parent=11 // pred_region
        _
      $region16: #{linear_net_forward.1} parent=11 // pred_fallthru
        _
      // Predicated region
      $region17: #{linear_net_forward.1} parent=11 // pred_check
        %p209 = pneg %p81
      $region18: #{linear_net_forward.1} parent=11 // pred_check_branch
        %211 = sbr.rel (%p209) target = $region20
      $region19: #{linear_net_forward.1} parent=11 // pred_region
        _
      $region20: #{linear_net_forward.1} parent=11 // pred_fallthru
        _
      // Predicated region
      $region21: #{linear_net_forward.1} parent=11 // pred_check
        %p212 = pneg %p102
      $region22: #{linear_net_forward.1} parent=11 // pred_check_branch
        %214 = sbr.rel (%p212) target = $region24
      $region23: #{linear_net_forward.1} parent=11 // pred_region
        _
      $region24: #{linear_net_forward.1} parent=11 // pred_fallthru
        _
      // Predicated region
      $region25: #{linear_net_forward.1} parent=11 // pred_check
        %p215 = pneg %p123
      $region26: #{linear_net_forward.1} parent=11 // pred_check_branch
        %217 = sbr.rel (%p215) target = $region28
      $region27: #{linear_net_forward.1} parent=11 // pred_region
        _
      $region28: #{linear_net_forward.1} parent=11 // pred_fallthru
        _
      // Predicated region
      $region29: #{linear_net_forward.1} parent=11 // pred_check
        %p218 = pneg %p144
      $region30: #{linear_net_forward.1} parent=11 // pred_check_branch
        %220 = sbr.rel (%p218) target = $region32
      $region31: #{linear_net_forward.1} parent=11 // pred_region
        _
      $region32: #{linear_net_forward.1} parent=11 // pred_fallthru
        _
      // Predicated region
      $region33: #{linear_net_forward.1} parent=11 // pred_check
        %p221 = pneg %p165
      $region34: #{linear_net_forward.1} parent=11 // pred_check_branch
        %223 = sbr.rel (%p221) target = $region36
      $region35: #{linear_net_forward.1} parent=11 // pred_region
        _
      $region36: #{linear_net_forward.1} parent=11 // pred_fallthru
        _
    $region12: #{linear_net_forward.1} parent=5 // pred_fallthru
      _
    %p224 = scmp.lt.s32.totalorder %s13, 2
    // Predicated region
    $region37: #{linear_net_forward.1} parent=5 // pred_check
      %p225 = pneg %p224
    $region38: #{linear_net_forward.1} parent=5 // pred_check_branch
      %227 = sbr.rel (%p225) target = $region40
    $region39: #{linear_net_forward.1} parent=5 // pred_region
      // Predicated region
      $region41: #{linear_net_forward.1} parent=39 // pred_check
        %p228 = pneg %p33
      $region42: #{linear_net_forward.1} parent=39 // pred_check_branch
        %230 = sbr.rel (%p228) target = $region44
      $region43: #{linear_net_forward.1} parent=39 // pred_region
        %s231 = smul.u32 32, %s13
        %p232 = scmp.lt.s32.totalorder %s231, 63
        %s233 = scalar_select %p232, %s231, 63
        %s234 = smul.addr %s233, 4
        %s235 = scalar_lea.vmem %s0, %s234
        %s236 = smul.u32 32, %s13
      $region44: #{linear_net_forward.1} parent=39 // pred_fallthru
        _
    $region40: #{linear_net_forward.1} parent=5 // pred_fallthru
      _
    %p237 = scmp.le.s32.totalorder 1, %s13
    %p238 = scmp.lt.s32.totalorder %s13, 3
    %p239 = pnand %p237, %p238
    %p240 = pneg %p239
    // Predicated region
    $region45: #{linear_net_forward.1} parent=5 // pred_check
      _
    $region46: #{linear_net_forward.1} parent=5 // pred_check_branch
      %242 = sbr.rel (%p239) target = $region48
    $region47: #{linear_net_forward.1} parent=5 // pred_region
      %s243 = ssub.s32 %s13, 1
      %s244 = smul.u32 32, %s18
      %p245 = scmp.lt.s32.totalorder %s244, 63
      %s246 = scalar_select %p245, %s244, 63
      %s247 = smul.addr %s246, 4
      %s248 = scalar_lea.vmem %s0, %s247
      %p249 = pneg %p39
      %p250 = pneg %p36
      %p251 = pneg %p60
      %p252 = pneg %p57
      %p253 = pneg %p81
      %p254 = pneg %p78
      %p255 = pneg %p102
      %p256 = pneg %p99
      %p257 = pneg %p123
      %p258 = pneg %p120
      %p259 = pneg %p144
      %p260 = pneg %p141
      %p261 = pneg %p165
      %p262 = pneg %p162
      %p263 = pneg %p191
      %p264 = pneg %p188
      %s265 = smul.u32 32, %s18
      %p266 = scmp.lt.s32.totalorder %s265, 63
      %s267 = scalar_select %p266, %s265, 63
      %s268 = smul.addr %s267, 8
      %s269 = scalar_lea.vmem %s7, %s268
      %s270 = smul.u32 32, %s18
      %p271 = scmp.lt.s32.totalorder %s270, 63
      %s272 = scalar_select %p271, %s270, 63
      %s273 = smul.addr %s272, 4
      %s274 = scalar_lea.vmem %s0, %s273
      %s275 = smul.u32 32, %s18
      %s276 = smul.u32 32, %s18
      %p277 = scmp.lt.s32.totalorder %s276, 63
      %s278 = scalar_select %p277, %s276, 63
      %s279 = smul.addr %s278, 8
      %s280 = scalar_lea.vmem %s7, %s279
      %s281 = smul.u32 32, %s18
      %v283 = vld [vmem:[%s274] sm:$0xf]
      %v284 = vld [vmem:[%s274 + $0x4] sm:$0xf]
      %v285 = vld [vmem:[%s274 + $0x8] sm:$0xf]
      %v286 = vld [vmem:[%s274 + $0xc] sm:$0xf]
      %v287 = vld [vmem:[%s274 + $0x10] sm:$0xf]
      %v288 = vld [vmem:[%s274 + $0x14] sm:$0xf]
      %v289 = vld [vmem:[%s274 + $0x18] sm:$0xf]
      %v290 = vld [vmem:[%s274 + $0x1c] sm:$0xf]
      %v291 = vld [vmem:[%s274 + $0x20] sm:$0xf]
      %v292 = vld [vmem:[%s274 + $0x24] sm:$0xf]
      %v293 = vld [vmem:[%s274 + $0x28] sm:$0xf]
      %v294 = vld [vmem:[%s274 + $0x2c] sm:$0xf]
      %v295 = vld [vmem:[%s274 + $0x30] sm:$0xf]
      %v296 = vld [vmem:[%s274 + $0x34] sm:$0xf]
      %v297 = vld [vmem:[%s274 + $0x38] sm:$0xf]
      %v298 = vld [vmem:[%s274 + $0x3c] sm:$0xf]
      %v299 = vld [vmem:[%s274 + $0x40] sm:$0xf]
      %v300 = vld [vmem:[%s274 + $0x44] sm:$0xf]
      %v301 = vld [vmem:[%s274 + $0x48] sm:$0xf]
      %v302 = vld [vmem:[%s274 + $0x4c] sm:$0xf]
      %v303 = vld [vmem:[%s274 + $0x50] sm:$0xf]
      %v304 = vld [vmem:[%s274 + $0x54] sm:$0xf]
      %v305 = vld [vmem:[%s274 + $0x58] sm:$0xf]
      %v306 = vld [vmem:[%s274 + $0x5c] sm:$0xf]
      %v307 = vld [vmem:[%s274 + $0x60] sm:$0xf]
      %v308 = vld [vmem:[%s274 + $0x64] sm:$0xf]
      %v309 = vld [vmem:[%s274 + $0x68] sm:$0xf]
      %v310 = vld [vmem:[%s274 + $0x6c] sm:$0xf]
      %v311 = vld [vmem:[%s274 + $0x70] sm:$0xf]
      %v312 = vld [vmem:[%s274 + $0x74] sm:$0xf]
      %v313 = vld [vmem:[%s274 + $0x78] sm:$0xf]
      %v314 = vld [vmem:[%s274 + $0x7c] sm:$0xf]
      %v315 = vld [vmem:[%s1] sm:$0xf]
      %v316 = vld [vmem:[%s1 + $0x4] sm:$0xf]
      %v317 = vld [vmem:[%s1 + $0x8] sm:$0xf]
      %v318 = vld [vmem:[%s1 + $0xc] sm:$0xf]
      %v319 = vld [vmem:[%s2] sm:$0x1]
      %v321 = vlaneseq
      %v322 = vshrl.u32 %v321, 7
      %v323 = vsub.s32 0, %v322
      %v324 = vrot.slane %v319, %v323
      %v358 = vunpack.c.l.b16 %v283
      %v359 = vunpack.c.l.b16 %v284
      %v360 = vunpack.c.l.b16 %v285
      %v361 = vunpack.c.l.b16 %v286
      %v362 = vunpack.c.l.b16 %v287
      %v363 = vunpack.c.l.b16 %v288
      %v364 = vunpack.c.l.b16 %v289
      %v365 = vunpack.c.l.b16 %v290
      %v366 = vunpack.c.l.b16 %v291
      %v367 = vunpack.c.l.b16 %v292
      %v368 = vunpack.c.l.b16 %v293
      %v369 = vunpack.c.l.b16 %v294
      %v370 = vunpack.c.l.b16 %v295
      %v371 = vunpack.c.l.b16 %v296
      %v372 = vunpack.c.l.b16 %v297
      %v373 = vunpack.c.l.b16 %v298
      %v374 = vunpack.c.l.b16 %v299
      %v375 = vunpack.c.l.b16 %v300
      %v376 = vunpack.c.l.b16 %v301
      %v377 = vunpack.c.l.b16 %v302
      %v378 = vunpack.c.l.b16 %v303
      %v379 = vunpack.c.l.b16 %v304
      %v380 = vunpack.c.l.b16 %v305
      %v381 = vunpack.c.l.b16 %v306
      %v382 = vunpack.c.l.b16 %v307
      %v383 = vunpack.c.l.b16 %v308
      %v384 = vunpack.c.l.b16 %v309
      %v385 = vunpack.c.l.b16 %v310
      %v386 = vunpack.c.l.b16 %v311
      %v387 = vunpack.c.l.b16 %v312
      %v388 = vunpack.c.l.b16 %v313
      %v389 = vunpack.c.l.b16 %v314
      %v390 = vpack.c.b16 %v359, %v358
      %v391 = vpack.c.b16 %v361, %v360
      %v392 = vpack.c.b16 %v363, %v362
      %v393 = vpack.c.b16 %v365, %v364
      %v394 = vpack.c.b16 %v367, %v366
      %v395 = vpack.c.b16 %v369, %v368
      %v396 = vpack.c.b16 %v371, %v370
      %v397 = vpack.c.b16 %v373, %v372
      %v398 = vpack.c.b16 %v375, %v374
      %v399 = vpack.c.b16 %v377, %v376
      %v400 = vpack.c.b16 %v379, %v378
      %v401 = vpack.c.b16 %v381, %v380
      %v402 = vpack.c.b16 %v383, %v382
      %v403 = vpack.c.b16 %v385, %v384
      %v404 = vpack.c.b16 %v387, %v386
      %v405 = vpack.c.b16 %v389, %v388
      %v410 = vunpack.c.l.b16 %v315
      %v411 = vunpack.c.l.b16 %v316
      %v412 = vunpack.c.l.b16 %v317
      %v413 = vunpack.c.l.b16 %v318
      %v414 = vpack.c.b16 %v411, %v410
      %v415 = vpack.c.b16 %v413, %v412
      %vm418 = vcmask 261120
      %v420 = vsel %vm418, %v390, 0
      %v423 = vsel %vm418, %v391, 0
      %v426 = vsel %vm418, %v392, 0
      %v429 = vsel %vm418, %v393, 0
      %v432 = vsel %vm418, %v394, 0
      %v435 = vsel %vm418, %v395, 0
      %v438 = vsel %vm418, %v396, 0
      %v441 = vsel %vm418, %v397, 0
      %v444 = vsel %vm418, %v398, 0
      %v447 = vsel %vm418, %v399, 0
      %v450 = vsel %vm418, %v400, 0
      %v453 = vsel %vm418, %v401, 0
      %v456 = vsel %vm418, %v402, 0
      %v459 = vsel %vm418, %v403, 0
      %v462 = vsel %vm418, %v404, 0
      %v465 = vsel %vm418, %v405, 0
      %467 = vmatprep.subr.bf16.mxu0 0
      %468 = vmatpush1.bf16.msra.mxu0 0
      %469 = vmatprep.subr.bf16.mxu0 0
      %470 = vmatpush1.bf16.msra.mxu0 0
      %471 = vmatprep.subr.bf16.mxu0 0
      %472 = vmatpush1.bf16.msra.mxu0 0
      %473 = vmatprep.subr.bf16.mxu0 0
      %474 = vmatpush1.bf16.msra.mxu0 0
      %475 = vmatprep.subr.bf16.mxu0 0
      %476 = vmatpush1.bf16.msra.mxu0 0
      %477 = vmatprep.subr.bf16.mxu0 0
      %478 = vmatpush1.bf16.msra.mxu0 0
      %479 = vmatprep.subr.bf16.mxu0 0
      %480 = vmatpush1.bf16.msra.mxu0 %v415
      %481 = vmatprep.subr.bf16.mxu0 0
      %482 = vmatpush1.bf16.msra.mxu0 %v414
      %483 = vmatprep.subr.bf16.mxu0 0
      %484 = vmatpush2.bf16.msra.mxu0 0
      %485 = vmatprep.subr.bf16.mxu0 0
      %486 = vmatpush2.bf16.msra.mxu0 0
      %487 = vmatprep.subr.bf16.mxu0 0
      %488 = vmatpush2.bf16.msra.mxu0 0
      %489 = vmatprep.subr.bf16.mxu0 0
      %490 = vmatpush2.bf16.msra.mxu0 0
      %491 = vmatprep.subr.bf16.mxu0 0
      %492 = vmatpush2.bf16.msra.mxu0 0
      %493 = vmatprep.subr.bf16.mxu0 0
      %494 = vmatpush2.bf16.msra.mxu0 0
      %495 = vmatprep.subr.bf16.mxu0 0
      %496 = vmatpush2.bf16.msra.mxu0 0
      %497 = vmatprep.subr.bf16.mxu0 0
      %498 = vmatpush2.bf16.msra.mxu0 0
      %499 = vmatprep.mubr.bf16.mxu0 0
      %500 = vmatmul.mubr.bf16.gmra.mxu0 %v420
      %v501 = vpop.f32.mrf.mxu0
      %v502 = vadd.f32 %v324, %v501
      %v503 = vpop.f32.mrf.mxu0
      %v504 = vpop.f32.mrf.mxu0
      %v505 = vadd.f32 %v324, %v504
      %v506 = vpop.f32.mrf.mxu0
      %507 = vmatprep.mubr.bf16.mxu0 0
      %508 = vmatmul.mubr.bf16.gmra.mxu0 %v423
      %v509 = vpop.f32.mrf.mxu0
      %v510 = vadd.f32 %v324, %v509
      %v511 = vpop.f32.mrf.mxu0
      %v512 = vpop.f32.mrf.mxu0
      %v513 = vadd.f32 %v324, %v512
      %v514 = vpop.f32.mrf.mxu0
      %515 = vmatprep.mubr.bf16.mxu0 0
      %516 = vmatmul.mubr.bf16.gmra.mxu0 %v426
      %v517 = vpop.f32.mrf.mxu0
      %v518 = vadd.f32 %v324, %v517
      %v519 = vpop.f32.mrf.mxu0
      %v520 = vpop.f32.mrf.mxu0
      %v521 = vadd.f32 %v324, %v520
      %v522 = vpop.f32.mrf.mxu0
      %523 = vmatprep.mubr.bf16.mxu0 0
      %524 = vmatmul.mubr.bf16.gmra.mxu0 %v429
      %v525 = vpop.f32.mrf.mxu0
      %v526 = vadd.f32 %v324, %v525
      %v527 = vpop.f32.mrf.mxu0
      %v528 = vpop.f32.mrf.mxu0
      %v529 = vadd.f32 %v324, %v528
      %v530 = vpop.f32.mrf.mxu0
      %531 = vmatprep.mubr.bf16.mxu0 0
      %532 = vmatmul.mubr.bf16.gmra.mxu0 %v432
      %v533 = vpop.f32.mrf.mxu0
      %v534 = vadd.f32 %v324, %v533
      %v535 = vpop.f32.mrf.mxu0
      %v536 = vpop.f32.mrf.mxu0
      %v537 = vadd.f32 %v324, %v536
      %v538 = vpop.f32.mrf.mxu0
      %539 = vmatprep.mubr.bf16.mxu0 0
      %540 = vmatmul.mubr.bf16.gmra.mxu0 %v435
      %v541 = vpop.f32.mrf.mxu0
      %v542 = vadd.f32 %v324, %v541
      %v543 = vpop.f32.mrf.mxu0
      %v544 = vpop.f32.mrf.mxu0
      %v545 = vadd.f32 %v324, %v544
      %v546 = vpop.f32.mrf.mxu0
      %547 = vmatprep.mubr.bf16.mxu0 0
      %548 = vmatmul.mubr.bf16.gmra.mxu0 %v438
      %v549 = vpop.f32.mrf.mxu0
      %v550 = vadd.f32 %v324, %v549
      %v551 = vpop.f32.mrf.mxu0
      %v552 = vpop.f32.mrf.mxu0
      %v553 = vadd.f32 %v324, %v552
      %v554 = vpop.f32.mrf.mxu0
      %555 = vmatprep.mubr.bf16.mxu0 0
      %556 = vmatmul.mubr.bf16.gmra.mxu0 %v441
      %v557 = vpop.f32.mrf.mxu0
      %v558 = vadd.f32 %v324, %v557
      %v559 = vpop.f32.mrf.mxu0
      %v560 = vpop.f32.mrf.mxu0
      %v561 = vadd.f32 %v324, %v560
      %v562 = vpop.f32.mrf.mxu0
      %563 = vmatprep.mubr.bf16.mxu0 0
      %564 = vmatmul.mubr.bf16.gmra.mxu0 %v444
      %v565 = vpop.f32.mrf.mxu0
      %v566 = vadd.f32 %v324, %v565
      %v567 = vpop.f32.mrf.mxu0
      %v568 = vpop.f32.mrf.mxu0
      %v569 = vadd.f32 %v324, %v568
      %v570 = vpop.f32.mrf.mxu0
      %571 = vmatprep.mubr.bf16.mxu0 0
      %572 = vmatmul.mubr.bf16.gmra.mxu0 %v447
      %v573 = vpop.f32.mrf.mxu0
      %v574 = vadd.f32 %v324, %v573
      %v575 = vpop.f32.mrf.mxu0
      %v576 = vpop.f32.mrf.mxu0
      %v577 = vadd.f32 %v324, %v576
      %v578 = vpop.f32.mrf.mxu0
      %579 = vmatprep.mubr.bf16.mxu0 0
      %580 = vmatmul.mubr.bf16.gmra.mxu0 %v450
      %v581 = vpop.f32.mrf.mxu0
      %v582 = vadd.f32 %v324, %v581
      %v583 = vpop.f32.mrf.mxu0
      %v584 = vpop.f32.mrf.mxu0
      %v585 = vadd.f32 %v324, %v584
      %v586 = vpop.f32.mrf.mxu0
      %587 = vmatprep.mubr.bf16.mxu0 0
      %588 = vmatmul.mubr.bf16.gmra.mxu0 %v453
      %v589 = vpop.f32.mrf.mxu0
      %v590 = vadd.f32 %v324, %v589
      %v591 = vpop.f32.mrf.mxu0
      %v592 = vpop.f32.mrf.mxu0
      %v593 = vadd.f32 %v324, %v592
      %v594 = vpop.f32.mrf.mxu0
      %595 = vmatprep.mubr.bf16.mxu0 0
      %596 = vmatmul.mubr.bf16.gmra.mxu0 %v456
      %v597 = vpop.f32.mrf.mxu0
      %v598 = vadd.f32 %v324, %v597
      %v599 = vpop.f32.mrf.mxu0
      %v600 = vpop.f32.mrf.mxu0
      %v601 = vadd.f32 %v324, %v600
      %v602 = vpop.f32.mrf.mxu0
      %603 = vmatprep.mubr.bf16.mxu0 0
      %604 = vmatmul.mubr.bf16.gmra.mxu0 %v459
      %v605 = vpop.f32.mrf.mxu0
      %v606 = vadd.f32 %v324, %v605
      %v607 = vpop.f32.mrf.mxu0
      %v608 = vpop.f32.mrf.mxu0
      %v609 = vadd.f32 %v324, %v608
      %v610 = vpop.f32.mrf.mxu0
      %611 = vmatprep.mubr.bf16.mxu0 0
      %612 = vmatmul.mubr.bf16.gmra.mxu0 %v462
      %v613 = vpop.f32.mrf.mxu0
      %v614 = vadd.f32 %v324, %v613
      %v615 = vpop.f32.mrf.mxu0
      %v616 = vpop.f32.mrf.mxu0
      %v617 = vadd.f32 %v324, %v616
      %v618 = vpop.f32.mrf.mxu0
      %619 = vmatprep.mubr.bf16.mxu0 0
      %620 = vmatmul.mubr.bf16.gmra.mxu0 %v465
      %v621 = vpop.f32.mrf.mxu0
      %v622 = vadd.f32 %v324, %v621
      %v623 = vpop.f32.mrf.mxu0
      %v624 = vpop.f32.mrf.mxu0
      %v625 = vadd.f32 %v324, %v624
      %v626 = vpop.f32.mrf.mxu0
      %627 = vdwg.mxu0
      %v628 = vmax.f32 %v502, 0.0
      %v629 = vmax.f32 %v505, 0.0
      %v630 = vmax.f32 %v510, 0.0
      %v631 = vmax.f32 %v513, 0.0
      %v632 = vmax.f32 %v518, 0.0
      %v633 = vmax.f32 %v521, 0.0
      %v634 = vmax.f32 %v526, 0.0
      %v635 = vmax.f32 %v529, 0.0
      %v636 = vmax.f32 %v534, 0.0
      %v637 = vmax.f32 %v537, 0.0
      %v638 = vmax.f32 %v542, 0.0
      %v639 = vmax.f32 %v545, 0.0
      %v640 = vmax.f32 %v550, 0.0
      %v641 = vmax.f32 %v553, 0.0
      %v642 = vmax.f32 %v558, 0.0
      %v643 = vmax.f32 %v561, 0.0
      %v644 = vmax.f32 %v566, 0.0
      %v645 = vmax.f32 %v569, 0.0
      %v646 = vmax.f32 %v574, 0.0
      %v647 = vmax.f32 %v577, 0.0
      %v648 = vmax.f32 %v582, 0.0
      %v649 = vmax.f32 %v585, 0.0
      %v650 = vmax.f32 %v590, 0.0
      %v651 = vmax.f32 %v593, 0.0
      %v652 = vmax.f32 %v598, 0.0
      %v653 = vmax.f32 %v601, 0.0
      %v654 = vmax.f32 %v606, 0.0
      %v655 = vmax.f32 %v609, 0.0
      %v656 = vmax.f32 %v614, 0.0
      %v657 = vmax.f32 %v617, 0.0
      %v658 = vmax.f32 %v622, 0.0
      %v659 = vmax.f32 %v625, 0.0
      %v660 = vpack.c.bf16 %v629, %v628
      %v661 = vpack.c.bf16 %v631, %v630
      %v662 = vpack.c.bf16 %v633, %v632
      %v663 = vpack.c.bf16 %v635, %v634
      %v664 = vpack.c.bf16 %v637, %v636
      %v665 = vpack.c.bf16 %v639, %v638
      %v666 = vpack.c.bf16 %v641, %v640
      %v667 = vpack.c.bf16 %v643, %v642
      %v668 = vpack.c.bf16 %v645, %v644
      %v669 = vpack.c.bf16 %v647, %v646
      %v670 = vpack.c.bf16 %v649, %v648
      %v671 = vpack.c.bf16 %v651, %v650
      %v672 = vpack.c.bf16 %v653, %v652
      %v673 = vpack.c.bf16 %v655, %v654
      %v674 = vpack.c.bf16 %v657, %v656
      %v675 = vpack.c.bf16 %v659, %v658
      %v676 = vld [vmem:[%s3] sm:$0xf]
      %v677 = vld [vmem:[%s3 + $0x4] sm:$0xf]
      %v678 = vld [vmem:[%s3 + $0x8] sm:$0xf]
      %v679 = vld [vmem:[%s3 + $0xc] sm:$0xf]
      %v680 = vld [vmem:[%s3 + $0x10] sm:$0xf]
      %v681 = vld [vmem:[%s3 + $0x14] sm:$0xf]
      %v682 = vld [vmem:[%s3 + $0x18] sm:$0xf]
      %v683 = vld [vmem:[%s3 + $0x1c] sm:$0xf]
      %v684 = vld [vmem:[%s4] sm:$0x1]
      %v686 = vlaneseq
      %v687 = vshrl.u32 %v686, 7
      %v688 = vsub.s32 0, %v687
      %v689 = vrot.slane %v684, %v688
      %v699 = vunpack.c.l.b16 %v676
      %v700 = vunpack.c.l.b16 %v677
      %v701 = vunpack.c.l.b16 %v678
      %v702 = vunpack.c.l.b16 %v679
      %v703 = vunpack.c.l.b16 %v680
      %v704 = vunpack.c.l.b16 %v681
      %v705 = vunpack.c.l.b16 %v682
      %v706 = vunpack.c.l.b16 %v683
      %v707 = vpack.c.b16 %v700, %v699
      %v708 = vpack.c.b16 %v702, %v701
      %v709 = vpack.c.b16 %v704, %v703
      %v710 = vpack.c.b16 %v706, %v705
      %vm715 = vcmask 523264
      %v717 = vsel %vm715, %v660, 0
      %v720 = vsel %vm715, %v661, 0
      %v723 = vsel %vm715, %v662, 0
      %v726 = vsel %vm715, %v663, 0
      %v729 = vsel %vm715, %v664, 0
      %v732 = vsel %vm715, %v665, 0
      %v735 = vsel %vm715, %v666, 0
      %v738 = vsel %vm715, %v667, 0
      %v741 = vsel %vm715, %v668, 0
      %v744 = vsel %vm715, %v669, 0
      %v747 = vsel %vm715, %v670, 0
      %v750 = vsel %vm715, %v671, 0
      %v753 = vsel %vm715, %v672, 0
      %v756 = vsel %vm715, %v673, 0
      %v759 = vsel %vm715, %v674, 0
      %v762 = vsel %vm715, %v675, 0
      %764 = vmatprep.subr.bf16.mxu0 0
      %765 = vmatpush1.bf16.msra.mxu0 0
      %766 = vmatprep.subr.bf16.mxu0 0
      %767 = vmatpush1.bf16.msra.mxu0 0
      %768 = vmatprep.subr.bf16.mxu0 0
      %769 = vmatpush1.bf16.msra.mxu0 0
      %770 = vmatprep.subr.bf16.mxu0 0
      %771 = vmatpush1.bf16.msra.mxu0 0
      %772 = vmatprep.subr.bf16.mxu0 0
      %773 = vmatpush1.bf16.msra.mxu0 %v710
      %774 = vmatprep.subr.bf16.mxu0 0
      %775 = vmatpush1.bf16.msra.mxu0 %v709
      %776 = vmatprep.subr.bf16.mxu0 0
      %777 = vmatpush1.bf16.msra.mxu0 %v708
      %778 = vmatprep.subr.bf16.mxu0 0
      %779 = vmatpush1.bf16.msra.mxu0 %v707
      %780 = vmatprep.subr.bf16.mxu0 0
      %781 = vmatpush2.bf16.msra.mxu0 0
      %782 = vmatprep.subr.bf16.mxu0 0
      %783 = vmatpush2.bf16.msra.mxu0 0
      %784 = vmatprep.subr.bf16.mxu0 0
      %785 = vmatpush2.bf16.msra.mxu0 0
      %786 = vmatprep.subr.bf16.mxu0 0
      %787 = vmatpush2.bf16.msra.mxu0 0
      %788 = vmatprep.subr.bf16.mxu0 0
      %789 = vmatpush2.bf16.msra.mxu0 0
      %790 = vmatprep.subr.bf16.mxu0 0
      %791 = vmatpush2.bf16.msra.mxu0 0
      %792 = vmatprep.subr.bf16.mxu0 0
      %793 = vmatpush2.bf16.msra.mxu0 0
      %794 = vmatprep.subr.bf16.mxu0 0
      %795 = vmatpush2.bf16.msra.mxu0 0
      %796 = vmatprep.mubr.bf16.mxu0 0
      %797 = vmatmul.mubr.bf16.gmra.mxu0 %v717
      %v798 = vpop.f32.mrf.mxu0
      %v799 = vadd.f32 %v689, %v798
      %v800 = vpop.f32.mrf.mxu0
      %v801 = vpop.f32.mrf.mxu0
      %v802 = vadd.f32 %v689, %v801
      %v803 = vpop.f32.mrf.mxu0
      %804 = vmatprep.mubr.bf16.mxu0 0
      %805 = vmatmul.mubr.bf16.gmra.mxu0 %v720
      %v806 = vpop.f32.mrf.mxu0
      %v807 = vadd.f32 %v689, %v806
      %v808 = vpop.f32.mrf.mxu0
      %v809 = vpop.f32.mrf.mxu0
      %v810 = vadd.f32 %v689, %v809
      %v811 = vpop.f32.mrf.mxu0
      %812 = vmatprep.mubr.bf16.mxu0 0
      %813 = vmatmul.mubr.bf16.gmra.mxu0 %v723
      %v814 = vpop.f32.mrf.mxu0
      %v815 = vadd.f32 %v689, %v814
      %v816 = vpop.f32.mrf.mxu0
      %v817 = vpop.f32.mrf.mxu0
      %v818 = vadd.f32 %v689, %v817
      %v819 = vpop.f32.mrf.mxu0
      %820 = vmatprep.mubr.bf16.mxu0 0
      %821 = vmatmul.mubr.bf16.gmra.mxu0 %v726
      %v822 = vpop.f32.mrf.mxu0
      %v823 = vadd.f32 %v689, %v822
      %v824 = vpop.f32.mrf.mxu0
      %v825 = vpop.f32.mrf.mxu0
      %v826 = vadd.f32 %v689, %v825
      %v827 = vpop.f32.mrf.mxu0
      %828 = vmatprep.mubr.bf16.mxu0 0
      %829 = vmatmul.mubr.bf16.gmra.mxu0 %v729
      %v830 = vpop.f32.mrf.mxu0
      %v831 = vadd.f32 %v689, %v830
      %v832 = vpop.f32.mrf.mxu0
      %v833 = vpop.f32.mrf.mxu0
      %v834 = vadd.f32 %v689, %v833
      %v835 = vpop.f32.mrf.mxu0
      %836 = vmatprep.mubr.bf16.mxu0 0
      %837 = vmatmul.mubr.bf16.gmra.mxu0 %v732
      %v838 = vpop.f32.mrf.mxu0
      %v839 = vadd.f32 %v689, %v838
      %v840 = vpop.f32.mrf.mxu0
      %v841 = vpop.f32.mrf.mxu0
      %v842 = vadd.f32 %v689, %v841
      %v843 = vpop.f32.mrf.mxu0
      %844 = vmatprep.mubr.bf16.mxu0 0
      %845 = vmatmul.mubr.bf16.gmra.mxu0 %v735
      %v846 = vpop.f32.mrf.mxu0
      %v847 = vadd.f32 %v689, %v846
      %v848 = vpop.f32.mrf.mxu0
      %v849 = vpop.f32.mrf.mxu0
      %v850 = vadd.f32 %v689, %v849
      %v851 = vpop.f32.mrf.mxu0
      %852 = vmatprep.mubr.bf16.mxu0 0
      %853 = vmatmul.mubr.bf16.gmra.mxu0 %v738
      %v854 = vpop.f32.mrf.mxu0
      %v855 = vadd.f32 %v689, %v854
      %v856 = vpop.f32.mrf.mxu0
      %v857 = vpop.f32.mrf.mxu0
      %v858 = vadd.f32 %v689, %v857
      %v859 = vpop.f32.mrf.mxu0
      %860 = vmatprep.mubr.bf16.mxu0 0
      %861 = vmatmul.mubr.bf16.gmra.mxu0 %v741
      %v862 = vpop.f32.mrf.mxu0
      %v863 = vadd.f32 %v689, %v862
      %v864 = vpop.f32.mrf.mxu0
      %v865 = vpop.f32.mrf.mxu0
      %v866 = vadd.f32 %v689, %v865
      %v867 = vpop.f32.mrf.mxu0
      %868 = vmatprep.mubr.bf16.mxu0 0
      %869 = vmatmul.mubr.bf16.gmra.mxu0 %v744
      %v870 = vpop.f32.mrf.mxu0
      %v871 = vadd.f32 %v689, %v870
      %v872 = vpop.f32.mrf.mxu0
      %v873 = vpop.f32.mrf.mxu0
      %v874 = vadd.f32 %v689, %v873
      %v875 = vpop.f32.mrf.mxu0
      %876 = vmatprep.mubr.bf16.mxu0 0
      %877 = vmatmul.mubr.bf16.gmra.mxu0 %v747
      %v878 = vpop.f32.mrf.mxu0
      %v879 = vadd.f32 %v689, %v878
      %v880 = vpop.f32.mrf.mxu0
      %v881 = vpop.f32.mrf.mxu0
      %v882 = vadd.f32 %v689, %v881
      %v883 = vpop.f32.mrf.mxu0
      %884 = vmatprep.mubr.bf16.mxu0 0
      %885 = vmatmul.mubr.bf16.gmra.mxu0 %v750
      %v886 = vpop.f32.mrf.mxu0
      %v887 = vadd.f32 %v689, %v886
      %v888 = vpop.f32.mrf.mxu0
      %v889 = vpop.f32.mrf.mxu0
      %v890 = vadd.f32 %v689, %v889
      %v891 = vpop.f32.mrf.mxu0
      %892 = vmatprep.mubr.bf16.mxu0 0
      %893 = vmatmul.mubr.bf16.gmra.mxu0 %v753
      %v894 = vpop.f32.mrf.mxu0
      %v895 = vadd.f32 %v689, %v894
      %v896 = vpop.f32.mrf.mxu0
      %v897 = vpop.f32.mrf.mxu0
      %v898 = vadd.f32 %v689, %v897
      %v899 = vpop.f32.mrf.mxu0
      %900 = vmatprep.mubr.bf16.mxu0 0
      %901 = vmatmul.mubr.bf16.gmra.mxu0 %v756
      %v902 = vpop.f32.mrf.mxu0
      %v903 = vadd.f32 %v689, %v902
      %v904 = vpop.f32.mrf.mxu0
      %v905 = vpop.f32.mrf.mxu0
      %v906 = vadd.f32 %v689, %v905
      %v907 = vpop.f32.mrf.mxu0
      %908 = vmatprep.mubr.bf16.mxu0 0
      %909 = vmatmul.mubr.bf16.gmra.mxu0 %v759
      %v910 = vpop.f32.mrf.mxu0
      %v911 = vadd.f32 %v689, %v910
      %v912 = vpop.f32.mrf.mxu0
      %v913 = vpop.f32.mrf.mxu0
      %v914 = vadd.f32 %v689, %v913
      %v915 = vpop.f32.mrf.mxu0
      %916 = vmatprep.mubr.bf16.mxu0 0
      %917 = vmatmul.mubr.bf16.gmra.mxu0 %v762
      %v918 = vpop.f32.mrf.mxu0
      %v919 = vadd.f32 %v689, %v918
      %v920 = vpop.f32.mrf.mxu0
      %v921 = vpop.f32.mrf.mxu0
      %v922 = vadd.f32 %v689, %v921
      %v923 = vpop.f32.mrf.mxu0
      %924 = vdwg.mxu0
      %v925 = vmax.f32 %v799, 0.0
      %v926 = vmax.f32 %v802, 0.0
      %v927 = vmax.f32 %v807, 0.0
      %v928 = vmax.f32 %v810, 0.0
      %v929 = vmax.f32 %v815, 0.0
      %v930 = vmax.f32 %v818, 0.0
      %v931 = vmax.f32 %v823, 0.0
      %v932 = vmax.f32 %v826, 0.0
      %v933 = vmax.f32 %v831, 0.0
      %v934 = vmax.f32 %v834, 0.0
      %v935 = vmax.f32 %v839, 0.0
      %v936 = vmax.f32 %v842, 0.0
      %v937 = vmax.f32 %v847, 0.0
      %v938 = vmax.f32 %v850, 0.0
      %v939 = vmax.f32 %v855, 0.0
      %v940 = vmax.f32 %v858, 0.0
      %v941 = vmax.f32 %v863, 0.0
      %v942 = vmax.f32 %v866, 0.0
      %v943 = vmax.f32 %v871, 0.0
      %v944 = vmax.f32 %v874, 0.0
      %v945 = vmax.f32 %v879, 0.0
      %v946 = vmax.f32 %v882, 0.0
      %v947 = vmax.f32 %v887, 0.0
      %v948 = vmax.f32 %v890, 0.0
      %v949 = vmax.f32 %v895, 0.0
      %v950 = vmax.f32 %v898, 0.0
      %v951 = vmax.f32 %v903, 0.0
      %v952 = vmax.f32 %v906, 0.0
      %v953 = vmax.f32 %v911, 0.0
      %v954 = vmax.f32 %v914, 0.0
      %v955 = vmax.f32 %v919, 0.0
      %v956 = vmax.f32 %v922, 0.0
      %v957 = vpack.c.bf16 %v926, %v925
      %v958 = vpack.c.bf16 %v928, %v927
      %v959 = vpack.c.bf16 %v930, %v929
      %v960 = vpack.c.bf16 %v932, %v931
      %v961 = vpack.c.bf16 %v934, %v933
      %v962 = vpack.c.bf16 %v936, %v935
      %v963 = vpack.c.bf16 %v938, %v937
      %v964 = vpack.c.bf16 %v940, %v939
      %v965 = vpack.c.bf16 %v942, %v941
      %v966 = vpack.c.bf16 %v944, %v943
      %v967 = vpack.c.bf16 %v946, %v945
      %v968 = vpack.c.bf16 %v948, %v947
      %v969 = vpack.c.bf16 %v950, %v949
      %v970 = vpack.c.bf16 %v952, %v951
      %v971 = vpack.c.bf16 %v954, %v953
      %v972 = vpack.c.bf16 %v956, %v955
      %v973 = vld [vmem:[%s5] sm:$0xf]
      %v974 = vld [vmem:[%s5 + $0x4] sm:$0xf]
      %v975 = vld [vmem:[%s5 + $0x8] sm:$0xf]
      %v976 = vld [vmem:[%s5 + $0xc] sm:$0xf]
      %v977 = vld [vmem:[%s5 + $0x10] sm:$0xf]
      %v978 = vld [vmem:[%s5 + $0x14] sm:$0xf]
      %v979 = vld [vmem:[%s5 + $0x18] sm:$0xf]
      %v980 = vld [vmem:[%s5 + $0x1c] sm:$0xf]
      %v981 = vld [vmem:[%s6] sm:$0x1]
      %v983 = vlaneseq
      %v984 = vshrl.u32 %v983, 7
      %v985 = vsub.s32 0, %v984
      %v986 = vrot.slane %v981, %v985
      %v996 = vunpack.c.l.b16 %v973
      %v997 = vunpack.c.l.b16 %v974
      %v998 = vunpack.c.l.b16 %v975
      %v999 = vunpack.c.l.b16 %v976
      %v1000 = vunpack.c.l.b16 %v977
      %v1001 = vunpack.c.l.b16 %v978
      %v1002 = vunpack.c.l.b16 %v979
      %v1003 = vunpack.c.l.b16 %v980
      %v1004 = vpack.c.b16 %v997, %v996
      %v1005 = vpack.c.b16 %v999, %v998
      %v1006 = vpack.c.b16 %v1001, %v1000
      %v1007 = vpack.c.b16 %v1003, %v1002
      %v1013 = vsel %vm715, %v957, 0
      %v1016 = vsel %vm715, %v958, 0
      %v1019 = vsel %vm715, %v959, 0
      %v1022 = vsel %vm715, %v960, 0
      %v1025 = vsel %vm715, %v961, 0
      %v1028 = vsel %vm715, %v962, 0
      %v1031 = vsel %vm715, %v963, 0
      %v1034 = vsel %vm715, %v964, 0
      %v1037 = vsel %vm715, %v965, 0
      %v1040 = vsel %vm715, %v966, 0
      %v1043 = vsel %vm715, %v967, 0
      %v1046 = vsel %vm715, %v968, 0
      %v1049 = vsel %vm715, %v969, 0
      %v1052 = vsel %vm715, %v970, 0
      %v1055 = vsel %vm715, %v971, 0
      %v1058 = vsel %vm715, %v972, 0
      %1060 = vmatprep.subr.bf16.mxu0 0
      %1061 = vmatpush1.bf16.msra.mxu0 0
      %1062 = vmatprep.subr.bf16.mxu0 0
      %1063 = vmatpush1.bf16.msra.mxu0 0
      %1064 = vmatprep.subr.bf16.mxu0 0
      %1065 = vmatpush1.bf16.msra.mxu0 0
      %1066 = vmatprep.subr.bf16.mxu0 0
      %1067 = vmatpush1.bf16.msra.mxu0 0
      %1068 = vmatprep.subr.bf16.mxu0 0
      %1069 = vmatpush1.bf16.msra.mxu0 %v1007
      %1070 = vmatprep.subr.bf16.mxu0 0
      %1071 = vmatpush1.bf16.msra.mxu0 %v1006
      %1072 = vmatprep.subr.bf16.mxu0 0
      %1073 = vmatpush1.bf16.msra.mxu0 %v1005
      %1074 = vmatprep.subr.bf16.mxu0 0
      %1075 = vmatpush1.bf16.msra.mxu0 %v1004
      %1076 = vmatprep.subr.bf16.mxu0 0
      %1077 = vmatpush2.bf16.msra.mxu0 0
      %1078 = vmatprep.subr.bf16.mxu0 0
      %1079 = vmatpush2.bf16.msra.mxu0 0
      %1080 = vmatprep.subr.bf16.mxu0 0
      %1081 = vmatpush2.bf16.msra.mxu0 0
      %1082 = vmatprep.subr.bf16.mxu0 0
      %1083 = vmatpush2.bf16.msra.mxu0 0
      %1084 = vmatprep.subr.bf16.mxu0 0
      %1085 = vmatpush2.bf16.msra.mxu0 0
      %1086 = vmatprep.subr.bf16.mxu0 0
      %1087 = vmatpush2.bf16.msra.mxu0 0
      %1088 = vmatprep.subr.bf16.mxu0 0
      %1089 = vmatpush2.bf16.msra.mxu0 0
      %1090 = vmatprep.subr.bf16.mxu0 0
      %1091 = vmatpush2.bf16.msra.mxu0 0
      %1092 = vmatprep.mubr.bf16.mxu0 0
      %1093 = vmatmul.mubr.bf16.gmra.mxu0 %v1013
      %v1094 = vpop.f32.mrf.mxu0
      %v1095 = vadd.f32 %v986, %v1094
      %v1096 = vpop.f32.mrf.mxu0
      %v1097 = vpop.f32.mrf.mxu0
      %v1098 = vadd.f32 %v986, %v1097
      %v1099 = vpop.f32.mrf.mxu0
      %1100 = vmatprep.mubr.bf16.mxu0 0
      %1101 = vmatmul.mubr.bf16.gmra.mxu0 %v1016
      %v1102 = vpop.f32.mrf.mxu0
      %v1103 = vadd.f32 %v986, %v1102
      %v1104 = vpop.f32.mrf.mxu0
      %v1105 = vpop.f32.mrf.mxu0
      %v1106 = vadd.f32 %v986, %v1105
      %v1107 = vpop.f32.mrf.mxu0
      %1108 = vmatprep.mubr.bf16.mxu0 0
      %1109 = vmatmul.mubr.bf16.gmra.mxu0 %v1019
      %v1110 = vpop.f32.mrf.mxu0
      %v1111 = vadd.f32 %v986, %v1110
      %v1112 = vpop.f32.mrf.mxu0
      %v1113 = vpop.f32.mrf.mxu0
      %v1114 = vadd.f32 %v986, %v1113
      %v1115 = vpop.f32.mrf.mxu0
      %1116 = vmatprep.mubr.bf16.mxu0 0
      %1117 = vmatmul.mubr.bf16.gmra.mxu0 %v1022
      %v1118 = vpop.f32.mrf.mxu0
      %v1119 = vadd.f32 %v986, %v1118
      %v1120 = vpop.f32.mrf.mxu0
      %v1121 = vpop.f32.mrf.mxu0
      %v1122 = vadd.f32 %v986, %v1121
      %v1123 = vpop.f32.mrf.mxu0
      %1124 = vmatprep.mubr.bf16.mxu0 0
      %1125 = vmatmul.mubr.bf16.gmra.mxu0 %v1025
      %v1126 = vpop.f32.mrf.mxu0
      %v1127 = vadd.f32 %v986, %v1126
      %v1128 = vpop.f32.mrf.mxu0
      %v1129 = vpop.f32.mrf.mxu0
      %v1130 = vadd.f32 %v986, %v1129
      %v1131 = vpop.f32.mrf.mxu0
      %1132 = vmatprep.mubr.bf16.mxu0 0
      %1133 = vmatmul.mubr.bf16.gmra.mxu0 %v1028
      %v1134 = vpop.f32.mrf.mxu0
      %v1135 = vadd.f32 %v986, %v1134
      %v1136 = vpop.f32.mrf.mxu0
      %v1137 = vpop.f32.mrf.mxu0
      %v1138 = vadd.f32 %v986, %v1137
      %v1139 = vpop.f32.mrf.mxu0
      %1140 = vmatprep.mubr.bf16.mxu0 0
      %1141 = vmatmul.mubr.bf16.gmra.mxu0 %v1031
      %v1142 = vpop.f32.mrf.mxu0
      %v1143 = vadd.f32 %v986, %v1142
      %v1144 = vpop.f32.mrf.mxu0
      %v1145 = vpop.f32.mrf.mxu0
      %v1146 = vadd.f32 %v986, %v1145
      %v1147 = vpop.f32.mrf.mxu0
      %1148 = vmatprep.mubr.bf16.mxu0 0
      %1149 = vmatmul.mubr.bf16.gmra.mxu0 %v1034
      %v1150 = vpop.f32.mrf.mxu0
      %v1151 = vadd.f32 %v986, %v1150
      %v1152 = vpop.f32.mrf.mxu0
      %v1153 = vpop.f32.mrf.mxu0
      %v1154 = vadd.f32 %v986, %v1153
      %v1155 = vpop.f32.mrf.mxu0
      %1156 = vmatprep.mubr.bf16.mxu0 0
      %1157 = vmatmul.mubr.bf16.gmra.mxu0 %v1037
      %v1158 = vpop.f32.mrf.mxu0
      %v1159 = vadd.f32 %v986, %v1158
      %v1160 = vpop.f32.mrf.mxu0
      %v1161 = vpop.f32.mrf.mxu0
      %v1162 = vadd.f32 %v986, %v1161
      %v1163 = vpop.f32.mrf.mxu0
      %1164 = vmatprep.mubr.bf16.mxu0 0
      %1165 = vmatmul.mubr.bf16.gmra.mxu0 %v1040
      %v1166 = vpop.f32.mrf.mxu0
      %v1167 = vadd.f32 %v986, %v1166
      %v1168 = vpop.f32.mrf.mxu0
      %v1169 = vpop.f32.mrf.mxu0
      %v1170 = vadd.f32 %v986, %v1169
      %v1171 = vpop.f32.mrf.mxu0
      %1172 = vmatprep.mubr.bf16.mxu0 0
      %1173 = vmatmul.mubr.bf16.gmra.mxu0 %v1043
      %v1174 = vpop.f32.mrf.mxu0
      %v1175 = vadd.f32 %v986, %v1174
      %v1176 = vpop.f32.mrf.mxu0
      %v1177 = vpop.f32.mrf.mxu0
      %v1178 = vadd.f32 %v986, %v1177
      %v1179 = vpop.f32.mrf.mxu0
      %1180 = vmatprep.mubr.bf16.mxu0 0
      %1181 = vmatmul.mubr.bf16.gmra.mxu0 %v1046
      %v1182 = vpop.f32.mrf.mxu0
      %v1183 = vadd.f32 %v986, %v1182
      %v1184 = vpop.f32.mrf.mxu0
      %v1185 = vpop.f32.mrf.mxu0
      %v1186 = vadd.f32 %v986, %v1185
      %v1187 = vpop.f32.mrf.mxu0
      %1188 = vmatprep.mubr.bf16.mxu0 0
      %1189 = vmatmul.mubr.bf16.gmra.mxu0 %v1049
      %v1190 = vpop.f32.mrf.mxu0
      %v1191 = vadd.f32 %v986, %v1190
      %v1192 = vpop.f32.mrf.mxu0
      %v1193 = vpop.f32.mrf.mxu0
      %v1194 = vadd.f32 %v986, %v1193
      %v1195 = vpop.f32.mrf.mxu0
      %1196 = vmatprep.mubr.bf16.mxu0 0
      %1197 = vmatmul.mubr.bf16.gmra.mxu0 %v1052
      %v1198 = vpop.f32.mrf.mxu0
      %v1199 = vadd.f32 %v986, %v1198
      %v1200 = vpop.f32.mrf.mxu0
      %v1201 = vpop.f32.mrf.mxu0
      %v1202 = vadd.f32 %v986, %v1201
      %v1203 = vpop.f32.mrf.mxu0
      %1204 = vmatprep.mubr.bf16.mxu0 0
      %1205 = vmatmul.mubr.bf16.gmra.mxu0 %v1055
      %v1206 = vpop.f32.mrf.mxu0
      %v1207 = vadd.f32 %v986, %v1206
      %v1208 = vpop.f32.mrf.mxu0
      %v1209 = vpop.f32.mrf.mxu0
      %v1210 = vadd.f32 %v986, %v1209
      %v1211 = vpop.f32.mrf.mxu0
      %1212 = vmatprep.mubr.bf16.mxu0 0
      %1213 = vmatmul.mubr.bf16.gmra.mxu0 %v1058
      %v1214 = vpop.f32.mrf.mxu0
      %v1215 = vadd.f32 %v986, %v1214
      %v1216 = vpop.f32.mrf.mxu0
      %v1217 = vpop.f32.mrf.mxu0
      %v1218 = vadd.f32 %v986, %v1217
      %v1219 = vpop.f32.mrf.mxu0
      %1220 = vdwg.mxu0
      %vm1221 = vcmask 130048
      %1222 = vst.msk [vmem:[%s280] sm:$0xff] %vm1221, %v1095
      %1223 = vst.msk [vmem:[%s280 + $0x8] sm:$0xff] %vm1221, %v1098
      %1224 = vst.msk [vmem:[%s280 + $0x10] sm:$0xff] %vm1221, %v1103
      %1225 = vst.msk [vmem:[%s280 + $0x18] sm:$0xff] %vm1221, %v1106
      %1226 = vst.msk [vmem:[%s280 + $0x20] sm:$0xff] %vm1221, %v1111
      %1227 = vst.msk [vmem:[%s280 + $0x28] sm:$0xff] %vm1221, %v1114
      %1228 = vst.msk [vmem:[%s280 + $0x30] sm:$0xff] %vm1221, %v1119
      %1229 = vst.msk [vmem:[%s280 + $0x38] sm:$0xff] %vm1221, %v1122
      %1230 = vst.msk [vmem:[%s280 + $0x40] sm:$0xff] %vm1221, %v1127
      %1231 = vst.msk [vmem:[%s280 + $0x48] sm:$0xff] %vm1221, %v1130
      %1232 = vst.msk [vmem:[%s280 + $0x50] sm:$0xff] %vm1221, %v1135
      %1233 = vst.msk [vmem:[%s280 + $0x58] sm:$0xff] %vm1221, %v1138
      %1234 = vst.msk [vmem:[%s280 + $0x60] sm:$0xff] %vm1221, %v1143
      %1235 = vst.msk [vmem:[%s280 + $0x68] sm:$0xff] %vm1221, %v1146
      %1236 = vst.msk [vmem:[%s280 + $0x70] sm:$0xff] %vm1221, %v1151
      %1237 = vst.msk [vmem:[%s280 + $0x78] sm:$0xff] %vm1221, %v1154
      %1238 = vst.msk [vmem:[%s280 + $0x80] sm:$0xff] %vm1221, %v1159
      %1239 = vst.msk [vmem:[%s280 + $0x88] sm:$0xff] %vm1221, %v1162
      %1240 = vst.msk [vmem:[%s280 + $0x90] sm:$0xff] %vm1221, %v1167
      %1241 = vst.msk [vmem:[%s280 + $0x98] sm:$0xff] %vm1221, %v1170
      %1242 = vst.msk [vmem:[%s280 + $0xa0] sm:$0xff] %vm1221, %v1175
      %1243 = vst.msk [vmem:[%s280 + $0xa8] sm:$0xff] %vm1221, %v1178
      %1244 = vst.msk [vmem:[%s280 + $0xb0] sm:$0xff] %vm1221, %v1183
      %1245 = vst.msk [vmem:[%s280 + $0xb8] sm:$0xff] %vm1221, %v1186
      %1246 = vst.msk [vmem:[%s280 + $0xc0] sm:$0xff] %vm1221, %v1191
      %1247 = vst.msk [vmem:[%s280 + $0xc8] sm:$0xff] %vm1221, %v1194
      %1248 = vst.msk [vmem:[%s280 + $0xd0] sm:$0xff] %vm1221, %v1199
      %1249 = vst.msk [vmem:[%s280 + $0xd8] sm:$0xff] %vm1221, %v1202
      %1250 = vst.msk [vmem:[%s280 + $0xe0] sm:$0xff] %vm1221, %v1207
      %1251 = vst.msk [vmem:[%s280 + $0xe8] sm:$0xff] %vm1221, %v1210
      %1252 = vst.msk [vmem:[%s280 + $0xf0] sm:$0xff] %vm1221, %v1215
      %1253 = vst.msk [vmem:[%s280 + $0xf8] sm:$0xff] %vm1221, %v1218
      %s1254 = smul.u32 32, %s18
      %p1255 = scmp.lt.s32.totalorder %s1254, 63
      %s1256 = scalar_select %p1255, %s1254, 63
      %s1257 = smul.addr %s1256, 8
      %s1258 = scalar_lea.vmem %s7, %s1257
      // Predicated region
      $region49: #{linear_net_forward.1} parent=47 // pred_check
        %p1259 = pneg %p188
      $region50: #{linear_net_forward.1} parent=47 // pred_check_branch
        %1261 = sbr.rel (%p1259) target = $region52
      $region51: #{linear_net_forward.1} parent=47 // pred_region
        %s1262 = smul.u32 32, %s18
      $region52: #{linear_net_forward.1} parent=47 // pred_fallthru
        _
    $region48: #{linear_net_forward.1} parent=5 // pred_fallthru
      _
    %p1263 = scmp.le.s32.totalorder 2, %s13
    // Predicated region
    $region53: #{linear_net_forward.1} parent=5 // pred_check
      %p1264 = pneg %p1263
    $region54: #{linear_net_forward.1} parent=5 // pred_check_branch
      %1266 = sbr.rel (%p1264) target = $region56
    $region55: #{linear_net_forward.1} parent=5 // pred_region
      %s1267 = ssub.s32 %s13, 2
      // Predicated region
      $region57: #{linear_net_forward.1} parent=55 // pred_check
        %p1268 = pneg %p194
      $region58: #{linear_net_forward.1} parent=55 // pred_check_branch
        %1270 = sbr.rel (%p1268) target = $region60
      $region59: #{linear_net_forward.1} parent=55 // pred_region
        %s1271 = smul.u32 32, %s19
        %p1272 = scmp.lt.s32.totalorder %s1271, 63
        %s1273 = scalar_select %p1272, %s1271, 63
        %s1274 = smul.addr %s1273, 8
        %s1275 = scalar_lea.vmem %s7, %s1274
      $region60: #{linear_net_forward.1} parent=55 // pred_fallthru
        _
    $region56: #{linear_net_forward.1} parent=5 // pred_fallthru
      _
  $region6: #{linear_net_forward.1} parent=0 // loop_footer
    %s17 = sadd.s32 1, %s13
  $region7: #{linear_net_forward.1} parent=0 // loop_footer_branch
    %12 = sbr.rel target = $region3
  $region8: #{linear_net_forward.1} parent=0 // loop_exit
    _

</llo_original>
